<compile_context>
chip_gen: v5e
topology: v5e:2x2
jax: 0.10.0
libtpu: 0.0.40
codegen_flags: <defaults>
</compile_context>

<pallas_src>
import math

import jax
import jax.numpy as jnp
from jax.experimental import pallas as pl
from jax.experimental.pallas import tpu as pltpu


def sbert_cluster_kernel(h_ref, m_ref, w1_ref, b1_ref,
                         wi2_ref, bi2_ref, wc2_ref, bc2_ref,
                         z_ref, c_ref):
    # h: [TB, S, H] (bf16), m: [TB, S] (f32)
    h = h_ref[...].astype(jnp.float32)
    m = m_ref[...]

    # get_embeddings: masked mean pooling over the sequence axis (f32 accum).
    summed = jnp.sum(h * m[:, :, None], axis=1)                 # [TB, H]
    count = jnp.sum(m, axis=1, keepdims=True)                   # [TB, 1]
    pooled = summed * pl.reciprocal(jnp.maximum(count, 1e-9), approx=True)

    # Fused first layers of both projectors: [TB, H] @ [H, 2H] -> ReLU -> split.
    h1 = jnp.dot(pooled.astype(w1_ref.dtype), w1_ref[...],
                 preferred_element_type=jnp.float32) + b1_ref[...]
    h1 = jnp.maximum(h1, 0.0)
    H = w1_ref.shape[0]
    hi = h1[:, :H]                                              # instance branch
    hc = h1[:, H:]                                              # cluster branch

    # instance_projector 2nd layer + L2 normalize (F.normalize eps = 1e-12).
    zi = jnp.dot(hi.astype(wi2_ref.dtype), wi2_ref[...],
                 preferred_element_type=jnp.float32) + bi2_ref[...]
    sumsq = jnp.sum(zi * zi, axis=1, keepdims=True)
    z_ref[...] = zi * jax.lax.rsqrt(jnp.maximum(sumsq, 1e-24))

    # cluster_projector 2nd layer + softmax over the 128-lane padded head
    # (padded logits == -1e30, so their probability underflows to 0).
    logits = jnp.dot(hc.astype(wc2_ref.dtype), wc2_ref[...],
                     preferred_element_type=jnp.float32) + bc2_ref[...]
    mx = jnp.max(logits, axis=1, keepdims=True)
    e = jnp.exp(logits - mx)
    c_ref[...] = e * pl.reciprocal(jnp.sum(e, axis=1, keepdims=True), approx=True)


def sentence_bert_cluster_forward(hidden, attention_mask, params, *, tb=None,
                                  compute_dtype=jnp.bfloat16):
    """Returns (z_i, z_j, c_i, c_j) like forward(mode='contrastive-clustering')."""
    B, S, H = hidden.shape
    P = params["wi2"].shape[1]            # instance projection dim (128)
    L = params["wc2"].shape[1]            # num_labels
    L_pad = max(128, pl.cdiv(L, 128) * 128)

    if tb is None:
        tb = B if B <= 128 else 128
    assert B % tb == 0 and (tb == B or tb % 8 == 0), \
        "batch tile must divide B and be a multiple of 8 (or equal B)"
    assert P % 128 == 0, "instance projection dim must be lane-aligned"

    # bf16 on the HBM side (dominant [B,S,H] read), f32 accumulation in-kernel.
    h = hidden.astype(compute_dtype)
    mask = attention_mask.astype(jnp.float32)                   # lane-dense [B, S]

    # Fuse the two first-layer (H -> H) matmuls into one H -> 2H matmul.
    w1 = jnp.concatenate([params["wi1"], params["wc1"]], axis=1).astype(compute_dtype)
    b1 = jnp.concatenate([params["bi1"], params["bc1"]], axis=1)

    wi2 = params["wi2"].astype(compute_dtype)
    bi2 = params["bi2"]

    # Pad cluster head to 128 output lanes; pad bias = -1e30 kills padded columns.
    wc2 = jnp.pad(params["wc2"], ((0, 0), (0, L_pad - L))).astype(compute_dtype)
    bc2 = jnp.pad(params["bc2"], ((0, 0), (0, L_pad - L)), constant_values=-1e30)

    def const_spec(shape):
        n = len(shape)
        return pl.BlockSpec(shape, lambda i, _n=n: (0,) * _n)

    grid = (B // tb,)
    z, cp = pl.pallas_call(
        sbert_cluster_kernel,
        grid=grid,
        in_specs=[
            pl.BlockSpec((tb, S, H), lambda i: (i, 0, 0)),      # hidden, batch-tiled
            pl.BlockSpec((tb, S), lambda i: (i, 0)),            # mask, batch-tiled
            const_spec(w1.shape), const_spec(b1.shape),
            const_spec(wi2.shape), const_spec(bi2.shape),
            const_spec(wc2.shape), const_spec(bc2.shape),
        ],
        out_specs=[
            pl.BlockSpec((tb, P), lambda i: (i, 0)),
            pl.BlockSpec((tb, L_pad), lambda i: (i, 0)),
        ],
        out_shape=(
            jax.ShapeDtypeStruct((B, P), jnp.float32),
            jax.ShapeDtypeStruct((B, L_pad), jnp.float32),
        ),
        compiler_params=pltpu.CompilerParams(
            dimension_semantics=("parallel",),      # megacore-shardable on v7x
            vmem_limit_bytes=48 * 1024 * 1024,      # headroom under v7x's 64 MiB
        ),
    )(h, mask, w1, b1, wi2, bi2, wc2, bc2)

    c = cp[:, :L]
    # get_embeddings is called twice on identical (eval-mode) encoder outputs,
    # so the second "view" equals the first: z_j == z_i, c_j == c_i.
    return z, z, c, c


def init_linear(key, fan_in, fan_out):
    """Deterministic init matching torch.nn.Linear defaults (U(-1/sqrt(in), 1/sqrt(in))).
    Weight is stored pre-transposed as [in, out]; bias as [1, out]."""
    kw, kb = jax.random.split(key)
    bound = 1.0 / math.sqrt(fan_in)
    w = jax.random.uniform(kw, (fan_in, fan_out), jnp.float32, -bound, bound)
    b = jax.random.uniform(kb, (1, fan_out), jnp.float32, -bound, bound)
    return w, b


if __name__ == "__main__":
    B, S, H = 16, 8, 32         # batch, seq len, hidden size (emb_size)
    P, L = 128, 8               # instance projection dim (fixed 128), num_labels
    TB = 8                      # batch tile -> 2 pipelined grid steps

    key = jax.random.PRNGKey(0)
    k_h, k_m, k_i1, k_i2, k_c1, k_c2 = jax.random.split(key, 6)

    # Synthetic BERT last hidden state + attention mask
    hidden = jax.random.normal(k_h, (B, S, H), jnp.float32)
    attention_mask = (jax.random.uniform(k_m, (B, S)) > 0.2).astype(jnp.int32)
    attention_mask = attention_mask.at[:, 0].set(1)   # at least one valid token

    wi1, bi1 = init_linear(k_i1, H, H)
    wi2, bi2 = init_linear(k_i2, H, P)
    wc1, bc1 = init_linear(k_c1, H, H)
    wc2, bc2 = init_linear(k_c2, H, L)
    params = dict(wi1=wi1, bi1=bi1, wi2=wi2, bi2=bi2,
                  wc1=wc1, bc1=bc1, wc2=wc2, bc2=bc2)

    z_i, z_j, c_i, c_j = sentence_bert_cluster_forward(
        hidden, attention_mask, params, tb=TB)
    jax.block_until_ready((z_i, z_j, c_i, c_j))

    assert z_i.shape == (B, P) and z_j.shape == (B, P)
    assert c_i.shape == (B, L) and c_j.shape == (B, L)
    # Sanity: softmax rows sum to ~1, z rows are ~unit-norm.
    assert bool(jnp.all(jnp.abs(jnp.sum(c_i, axis=1) - 1.0) < 1e-2))
    assert bool(jnp.all(jnp.abs(jnp.linalg.norm(z_i, axis=1) - 1.0) < 1e-2))
    print("KERNEL_OK")
</pallas_src>

<mosaic_0001>
module attributes {stable_mosaic.version = 11 : i64} {
  func.func @sbert_cluster_kernel(%arg0: i32, %arg1: memref<8x8x32xbf16, #tpu.memory_space<vmem>>, %arg2: memref<8x8xf32, #tpu.memory_space<vmem>>, %arg3: memref<32x64xbf16, #tpu.memory_space<vmem>>, %arg4: memref<1x64xf32, #tpu.memory_space<vmem>>, %arg5: memref<32x128xbf16, #tpu.memory_space<vmem>>, %arg6: memref<1x128xf32, #tpu.memory_space<vmem>>, %arg7: memref<32x128xbf16, #tpu.memory_space<vmem>>, %arg8: memref<1x128xf32, #tpu.memory_space<vmem>>, %arg9: memref<8x128xf32, #tpu.memory_space<vmem>>, %arg10: memref<8x128xf32, #tpu.memory_space<vmem>>) attributes {dimension_semantics = [#tpu.dimension_semantics<parallel>], iteration_bounds = array<i64: 2>, scalar_prefetch = 0 : i64, scratch_operands = 0 : i64, tpu.core_type = #tpu.core_type<tc>, window_params = [{transform_indices = @transform_0, window_bounds = array<i64: 8, 8, 32>}, {transform_indices = @transform_1, window_bounds = array<i64: 8, 8>}, {pipeline_mode = #tpu.pipeline_mode<synchronous>, transform_indices = @transform_2, window_bounds = array<i64: 32, 64>}, {pipeline_mode = #tpu.pipeline_mode<synchronous>, transform_indices = @transform_3, window_bounds = array<i64: 1, 64>}, {pipeline_mode = #tpu.pipeline_mode<synchronous>, transform_indices = @transform_4, window_bounds = array<i64: 32, 128>}, {pipeline_mode = #tpu.pipeline_mode<synchronous>, transform_indices = @transform_5, window_bounds = array<i64: 1, 128>}, {pipeline_mode = #tpu.pipeline_mode<synchronous>, transform_indices = @transform_6, window_bounds = array<i64: 32, 128>}, {pipeline_mode = #tpu.pipeline_mode<synchronous>, transform_indices = @transform_7, window_bounds = array<i64: 1, 128>}, {transform_indices = @transform_8, window_bounds = array<i64: 8, 128>}, {transform_indices = @transform_9, window_bounds = array<i64: 8, 128>}]} {
    %c0 = arith.constant 0 : index
    %c0_0 = arith.constant 0 : index
    %c0_1 = arith.constant 0 : index
    %0 = vector.load %arg1[%c0, %c0_0, %c0_1] : memref<8x8x32xbf16, #tpu.memory_space<vmem>>, vector<8x8x32xbf16>
    %1 = arith.extf %0 : vector<8x8x32xbf16> to vector<8x8x32xf32>
    %c0_2 = arith.constant 0 : index
    %c0_3 = arith.constant 0 : index
    %2 = vector.load %arg2[%c0_2, %c0_3] : memref<8x8xf32, #tpu.memory_space<vmem>>, vector<8x8xf32>
    %3 = vector.shape_cast %2 : vector<8x8xf32> to vector<8x8x1xf32>
    %4 = vector.broadcast %3 : vector<8x8x1xf32> to vector<8x8x32xf32>
    %5 = arith.mulf %1, %4 : vector<8x8x32xf32>
    %cst = arith.constant dense<0.000000e+00> : vector<8x32xf32>
    %6 = vector.multi_reduction <add>, %5, %cst [1] : vector<8x8x32xf32> to vector<8x32xf32>
    %cst_4 = arith.constant dense<0.000000e+00> : vector<8xf32>
    %7 = vector.multi_reduction <add>, %2, %cst_4 [1] : vector<8x8xf32> to vector<8xf32>
    %8 = vector.shape_cast %7 : vector<8xf32> to vector<8x1xf32>
    %cst_5 = arith.constant 9.99999971E-10 : f32
    %9 = vector.broadcast %cst_5 : f32 to vector<8x1xf32>
    %10 = arith.maximumf %8, %9 : vector<8x1xf32>
    %11 = tpu.reciprocal %10 {approx = true} : vector<8x1xf32> -> vector<8x1xf32>
    %12 = vector.broadcast %11 : vector<8x1xf32> to vector<8x32xf32>
    %13 = arith.mulf %6, %12 : vector<8x32xf32>
    %14 = arith.truncf %13 : vector<8x32xf32> to vector<8x32xbf16>
    %c0_6 = arith.constant 0 : index
    %c0_7 = arith.constant 0 : index
    %15 = vector.load %arg3[%c0_6, %c0_7] : memref<32x64xbf16, #tpu.memory_space<vmem>>, vector<32x64xbf16>
    %cst_8 = arith.constant dense<0.000000e+00> : vector<8x64xf32>
    %16 = tpu.matmul %14, %15, %cst_8 {dimension_numbers = #tpu.dot_dimension_numbers<[1], [0], [0], [1], [0, 0, 1, 1], [], []>} : vector<8x32xbf16>, vector<32x64xbf16>, vector<8x64xf32> -> vector<8x64xf32>
    %c0_9 = arith.constant 0 : index
    %c0_10 = arith.constant 0 : index
    %17 = vector.load %arg4[%c0_9, %c0_10] : memref<1x64xf32, #tpu.memory_space<vmem>>, vector<1x64xf32>
    %18 = vector.broadcast %17 : vector<1x64xf32> to vector<8x64xf32>
    %19 = arith.addf %16, %18 : vector<8x64xf32>
    %cst_11 = arith.constant 0.000000e+00 : f32
    %20 = vector.broadcast %cst_11 : f32 to vector<8x64xf32>
    %21 = arith.maximumf %19, %20 : vector<8x64xf32>
    %22 = vector.extract_strided_slice %21 {offsets = [0, 0], sizes = [8, 32], strides = [1, 1]} : vector<8x64xf32> to vector<8x32xf32>
    %23 = vector.extract_strided_slice %21 {offsets = [0, 32], sizes = [8, 32], strides = [1, 1]} : vector<8x64xf32> to vector<8x32xf32>
    %24 = arith.truncf %22 : vector<8x32xf32> to vector<8x32xbf16>
    %c0_12 = arith.constant 0 : index
    %c0_13 = arith.constant 0 : index
    %25 = vector.load %arg5[%c0_12, %c0_13] : memref<32x128xbf16, #tpu.memory_space<vmem>>, vector<32x128xbf16>
    %cst_14 = arith.constant dense<0.000000e+00> : vector<8x128xf32>
    %26 = tpu.matmul %24, %25, %cst_14 {dimension_numbers = #tpu.dot_dimension_numbers<[1], [0], [0], [1], [0, 0, 1, 1], [], []>} : vector<8x32xbf16>, vector<32x128xbf16>, vector<8x128xf32> -> vector<8x128xf32>
    %c0_15 = arith.constant 0 : index
    %c0_16 = arith.constant 0 : index
    %27 = vector.load %arg6[%c0_15, %c0_16] : memref<1x128xf32, #tpu.memory_space<vmem>>, vector<1x128xf32>
    %28 = vector.broadcast %27 : vector<1x128xf32> to vector<8x128xf32>
    %29 = arith.addf %26, %28 : vector<8x128xf32>
    %30 = arith.mulf %29, %29 : vector<8x128xf32>
    %cst_17 = arith.constant dense<0.000000e+00> : vector<8xf32>
    %31 = vector.multi_reduction <add>, %30, %cst_17 [1] : vector<8x128xf32> to vector<8xf32>
    %32 = vector.shape_cast %31 : vector<8xf32> to vector<8x1xf32>
    %cst_18 = arith.constant 1.000000e-24 : f32
    %33 = vector.broadcast %cst_18 : f32 to vector<8x1xf32>
    %34 = arith.maximumf %32, %33 : vector<8x1xf32>
    %35 = math.rsqrt %34 : vector<8x1xf32>
    %36 = vector.broadcast %35 : vector<8x1xf32> to vector<8x128xf32>
    %37 = arith.mulf %29, %36 : vector<8x128xf32>
    %c0_19 = arith.constant 0 : index
    %c0_20 = arith.constant 0 : index
    %38 = vector.load %arg9[%c0_19, %c0_20] : memref<8x128xf32, #tpu.memory_space<vmem>>, vector<8x128xf32>
    tpu.vector_store %arg9[%c0_19, %c0_20], %37 {strides = array<i32>} : memref<8x128xf32, #tpu.memory_space<vmem>>, vector<8x128xf32>,
    %39 = arith.truncf %23 : vector<8x32xf32> to vector<8x32xbf16>
    %c0_21 = arith.constant 0 : index
    %c0_22 = arith.constant 0 : index
    %40 = vector.load %arg7[%c0_21, %c0_22] : memref<32x128xbf16, #tpu.memory_space<vmem>>, vector<32x128xbf16>
    %cst_23 = arith.constant dense<0.000000e+00> : vector<8x128xf32>
    %41 = tpu.matmul %39, %40, %cst_23 {dimension_numbers = #tpu.dot_dimension_numbers<[1], [0], [0], [1], [0, 0, 1, 1], [], []>} : vector<8x32xbf16>, vector<32x128xbf16>, vector<8x128xf32> -> vector<8x128xf32>
    %c0_24 = arith.constant 0 : index
    %c0_25 = arith.constant 0 : index
    %42 = vector.load %arg8[%c0_24, %c0_25] : memref<1x128xf32, #tpu.memory_space<vmem>>, vector<1x128xf32>
    %43 = vector.broadcast %42 : vector<1x128xf32> to vector<8x128xf32>
    %44 = arith.addf %41, %43 : vector<8x128xf32>
    %cst_26 = arith.constant dense<0xFF800000> : vector<8xf32>
    %45 = vector.multi_reduction <maximumf>, %44, %cst_26 [1] : vector<8x128xf32> to vector<8xf32>
    %46 = vector.shape_cast %45 : vector<8xf32> to vector<8x1xf32>
    %47 = vector.broadcast %46 : vector<8x1xf32> to vector<8x128xf32>
    %48 = arith.subf %44, %47 : vector<8x128xf32>
    %49 = math.exp %48 : vector<8x128xf32>
    %cst_27 = arith.constant dense<0.000000e+00> : vector<8xf32>
    %50 = vector.multi_reduction <add>, %49, %cst_27 [1] : vector<8x128xf32> to vector<8xf32>
    %51 = vector.shape_cast %50 : vector<8xf32> to vector<8x1xf32>
    %52 = tpu.reciprocal %51 {approx = true} : vector<8x1xf32> -> vector<8x1xf32>
    %53 = vector.broadcast %52 : vector<8x1xf32> to vector<8x128xf32>
    %54 = arith.mulf %49, %53 : vector<8x128xf32>
    %c0_28 = arith.constant 0 : index
    %c0_29 = arith.constant 0 : index
    %55 = vector.load %arg10[%c0_28, %c0_29] : memref<8x128xf32, #tpu.memory_space<vmem>>, vector<8x128xf32>
    tpu.vector_store %arg10[%c0_28, %c0_29], %54 {strides = array<i32>} : memref<8x128xf32, #tpu.memory_space<vmem>>, vector<8x128xf32>,
    return
  }
  func.func @transform_0(%arg0: i32) -> (i32, i32, i32) {
    %c0_i32 = arith.constant 0 : i32
    %c0_i32_0 = arith.constant 0 : i32
    %c0_i32_1 = arith.constant 0 : i32
    return %arg0, %c0_i32, %c0_i32_0 : i32, i32, i32
  }
  func.func @transform_1(%arg0: i32) -> (i32, i32) {
    %c0_i32 = arith.constant 0 : i32
    %c0_i32_0 = arith.constant 0 : i32
    return %arg0, %c0_i32 : i32, i32
  }
  func.func @transform_2(%arg0: i32) -> (i32, i32) {
    %c0_i32 = arith.constant 0 : i32
    %c0_i32_0 = arith.constant 0 : i32
    %c0_i32_1 = arith.constant 0 : i32
    return %c0_i32, %c0_i32_0 : i32, i32
  }
  func.func @transform_3(%arg0: i32) -> (i32, i32) {
    %c0_i32 = arith.constant 0 : i32
    %c0_i32_0 = arith.constant 0 : i32
    %c0_i32_1 = arith.constant 0 : i32
    return %c0_i32, %c0_i32_0 : i32, i32
  }
  func.func @transform_4(%arg0: i32) -> (i32, i32) {
    %c0_i32 = arith.constant 0 : i32
    %c0_i32_0 = arith.constant 0 : i32
    %c0_i32_1 = arith.constant 0 : i32
    return %c0_i32, %c0_i32_0 : i32, i32
  }
  func.func @transform_5(%arg0: i32) -> (i32, i32) {
    %c0_i32 = arith.constant 0 : i32
    %c0_i32_0 = arith.constant 0 : i32
    %c0_i32_1 = arith.constant 0 : i32
    return %c0_i32, %c0_i32_0 : i32, i32
  }
  func.func @transform_6(%arg0: i32) -> (i32, i32) {
    %c0_i32 = arith.constant 0 : i32
    %c0_i32_0 = arith.constant 0 : i32
    %c0_i32_1 = arith.constant 0 : i32
    return %c0_i32, %c0_i32_0 : i32, i32
  }
  func.func @transform_7(%arg0: i32) -> (i32, i32) {
    %c0_i32 = arith.constant 0 : i32
    %c0_i32_0 = arith.constant 0 : i32
    %c0_i32_1 = arith.constant 0 : i32
    return %c0_i32, %c0_i32_0 : i32, i32
  }
  func.func @transform_8(%arg0: i32) -> (i32, i32) {
    %c0_i32 = arith.constant 0 : i32
    %c0_i32_0 = arith.constant 0 : i32
    return %arg0, %c0_i32 : i32, i32
  }
  func.func @transform_9(%arg0: i32) -> (i32, i32) {
    %c0_i32 = arith.constant 0 : i32
    %c0_i32_0 = arith.constant 0 : i32
    return %arg0, %c0_i32 : i32, i32
  }
}

</mosaic_0001>

<llo_original>
// kernel: tpu_custom_call.1
$region0: #{tpu_custom_call.1}
  #allocation0 [shape = 'u32[]', space=smem, size = 0x4, offset = 0x4, fixed_abs, tag = 'smem constant byte address 0x4 - core index']
  #allocation1 [shape = 'u32[72,128]{1,0:T(1,128)}', space=vmem, size = 0x9000, scoped, tag = 'internal scratch']
  %s0 = inlined_call_operand.hbm [shape: bf16[16,8,32], index: 0, kind: input, shape index: {}]
  %s1 = inlined_call_operand.vmem [shape: f32[16,8], index: 1, kind: input, shape index: {}]
  %s2 = inlined_call_operand.vmem [shape: bf16[32,64], index: 2, kind: input, shape index: {}]
  %s3 = inlined_call_operand.vmem [shape: f32[1,64], index: 3, kind: input, shape index: {}]
  %s4 = inlined_call_operand.hbm [shape: bf16[32,128], index: 4, kind: input, shape index: {}]
  %s5 = inlined_call_operand.vmem [shape: f32[1,128], index: 5, kind: input, shape index: {}]
  %s6 = inlined_call_operand.hbm [shape: bf16[32,128], index: 6, kind: input, shape index: {}]
  %s7 = inlined_call_operand.vmem [shape: f32[1,128], index: 7, kind: input, shape index: {}]
  %s8 = inlined_call_operand.hbm [shape: f32[16,128], index: 8, kind: output, shape index: {0}]
  %s9 = inlined_call_operand.hbm [shape: f32[16,128], index: 9, kind: output, shape index: {1}]
  %10 = xla_tuple %s8, %s9
  %s11 = sld [smem:[#allocation0]]
  $region85: #{tpu_custom_call.1} parent=0
    _
  %s13 = ssub.s32 1, %s11
  %s14 = scalar_select 0, %s13, %s11
  $region1: #{tpu_custom_call.1} parent=0
    #allocation2 [shape = 'u8[32768]{0}', space=vmem, size = 0x8000, scoped, tag = 'input window, operand 0']
    #allocation3 [shape = 's32[2]{0}', space=sflag, size = 0x8, scoped, tag = 'scoped memory for tpu_custom_call.1']
    #allocation4 [shape = 's32[2]{0}', space=sflag, size = 0x8, scoped, tag = 'scoped memory for tpu_custom_call.1']
    #allocation5 [shape = 'u8[8192]{0}', space=vmem, size = 0x2000, scoped, tag = 'input window, operand 4, single buffered']
    #allocation6 [shape = 's32[1]{0}', space=sflag, size = 0x4, scoped, tag = 'scoped memory for tpu_custom_call.1']
    #allocation7 [shape = 'u8[8192]{0}', space=vmem, size = 0x2000, scoped, tag = 'input window, operand 6, single buffered']
    #allocation8 [shape = 'u8[8192]{0}', space=vmem, size = 0x2000, scoped, tag = 'output window, operand 0']
    #allocation9 [shape = 'u8[8192]{0}', space=vmem, size = 0x2000, scoped, tag = 'output window, operand 1']
    #allocation10 [shape = 's32[2]{0}', space=sflag, size = 0x8, scoped, tag = 'scoped memory for tpu_custom_call.1']
    %15 = vsyncpa [#allocation3], 0
    %s16 = scalar_lea.sflag [#allocation3], 1
    %17 = vsyncpa %s16, 0
    %18 = vsyncpa [#allocation6], 0
    %19 = vsyncpa [#allocation4], 0
    %s20 = scalar_lea.sflag [#allocation4], 1
    %21 = vsyncpa %s20, 0
    %22 = vsyncpa [#allocation10], 0
    %s23 = scalar_lea.sflag [#allocation10], 1
    %24 = vsyncpa %s23, 0
    loop: start=0, step=1, limit=4
    $region2: #{tpu_custom_call.1} parent=1 // loop_pre_header
      _
    $region3: #{tpu_custom_call.1} parent=1 // loop_header
      %s26 = sphi 0, %s30
      %p27 = scmp.ge.s32.totalorder %s26, 4
      %s36 = sphi 0, %s38
      %s39 = sphi 0, %s36
      %s40 = sphi 0, %s39
      %s56 = sphi 0, %s40
      %s62 = sphi 0, %s64
      %s65 = sphi 0, %s62
      %s66 = sphi 0, %s65
      %s82 = sphi 0, %s66
      %s86 = sphi 0, %s86
      %s88 = sphi 0, %s86
      %s89 = sphi 0, %s88
      %s103 = sphi 0, %s89
      %s107 = sphi 0, %s107
      %s109 = sphi 0, %s107
      %s110 = sphi 0, %s109
      %s124 = sphi 0, %s110
      %s128 = sphi 0, %s128
      %s130 = sphi 0, %s128
      %s131 = sphi 0, %s130
      %s145 = sphi 0, %s131
      %s149 = sphi 0, %s149
      %s151 = sphi 0, %s149
      %s152 = sphi 0, %s151
      %s166 = sphi 0, %s152
      %s170 = sphi 0, %s170
      %s172 = sphi 0, %s170
      %s173 = sphi 0, %s172
      %s187 = sphi 0, %s173
      %s191 = sphi 0, %s191
      %s193 = sphi 0, %s191
      %s194 = sphi 0, %s193
      %s208 = sphi 0, %s194
      %s214 = sphi 0, %s216
      %s217 = sphi 0, %s214
      %s218 = sphi 0, %s217
      %s234 = sphi 0, %s218
      %s240 = sphi 0, %s242
      %s243 = sphi 0, %s240
      %s244 = sphi 0, %s243
      %s260 = sphi 0, %s244
    $region4: #{tpu_custom_call.1} parent=1 // loop_header_branch
      %29 = sbr.rel (%p27) target = $region8
    $region5: #{tpu_custom_call.1} parent=1 // loop_body
      %s31 = ssub.s32 %s26, 1
      %s32 = ssub.s32 %s26, 2
      %s33 = sadd.s32 %s26, 1
      %s34 = ssub.s32 %s26, %s33
      %p35 = scmp.eq.s32.totalorder %s34, 0
      %s37 = sadd.s32 %s36, 1
      %s38 = scalar_select %p35, %s36, %s37
      %p41 = pneg %p35
      %p42 = scmp.eq.s32.totalorder %s26, 1
      %p43 = por %p41, %p42
      %p44 = scmp.ne.s32.totalorder %s36, %s39
      %p45 = scmp.eq.s32.totalorder %s26, 0
      %p46 = por %p44, %p45
      %p47 = scmp.ne.s32.totalorder %s36, %s39
      %p48 = scmp.eq.s32.totalorder %s31, 1
      %p49 = por %p47, %p48
      %p50 = scmp.ne.s32.totalorder %s39, %s40
      %p51 = scmp.eq.s32.totalorder %s31, 0
      %p52 = por %p50, %p51
      %p53 = scmp.ne.s32.totalorder %s39, %s40
      %p54 = scmp.eq.s32.totalorder %s32, 1
      %p55 = por %p53, %p54
      %p57 = scmp.ne.s32.totalorder %s40, %s56
      %p58 = scmp.eq.s32.totalorder %s32, 0
      %p59 = por %p57, %p58
      %s60 = ssub.s32 %s26, %s33
      %p61 = scmp.eq.s32.totalorder %s60, 0
      %s63 = sadd.s32 %s62, 1
      %s64 = scalar_select %p61, %s62, %s63
      %p67 = pneg %p61
      %p68 = scmp.eq.s32.totalorder %s26, 1
      %p69 = por %p67, %p68
      %p70 = scmp.ne.s32.totalorder %s62, %s65
      %p71 = scmp.eq.s32.totalorder %s26, 0
      %p72 = por %p70, %p71
      %p73 = scmp.ne.s32.totalorder %s62, %s65
      %p74 = scmp.eq.s32.totalorder %s31, 1
      %p75 = por %p73, %p74
      %p76 = scmp.ne.s32.totalorder %s65, %s66
      %p77 = scmp.eq.s32.totalorder %s31, 0
      %p78 = por %p76, %p77
      %p79 = scmp.ne.s32.totalorder %s65, %s66
      %p80 = scmp.eq.s32.totalorder %s32, 1
      %p81 = por %p79, %p80
      %p83 = scmp.ne.s32.totalorder %s66, %s82
      %p84 = scmp.eq.s32.totalorder %s32, 0
      %p85 = por %p83, %p84
      %s87 = sadd.s32 %s86, 1
      %p90 = scmp.eq.s32.totalorder %s26, 1
      %p91 = scmp.ne.s32.totalorder %s86, %s88
      %p92 = scmp.eq.s32.totalorder %s26, 0
      %p93 = por %p91, %p92
      %p94 = scmp.ne.s32.totalorder %s86, %s88
      %p95 = scmp.eq.s32.totalorder %s31, 1
      %p96 = por %p94, %p95
      %p97 = scmp.ne.s32.totalorder %s88, %s89
      %p98 = scmp.eq.s32.totalorder %s31, 0
      %p99 = por %p97, %p98
      %p100 = scmp.ne.s32.totalorder %s88, %s89
      %p101 = scmp.eq.s32.totalorder %s32, 1
      %p102 = por %p100, %p101
      %p104 = scmp.ne.s32.totalorder %s89, %s103
      %p105 = scmp.eq.s32.totalorder %s32, 0
      %p106 = por %p104, %p105
      %s108 = sadd.s32 %s107, 1
      %p111 = scmp.eq.s32.totalorder %s26, 1
      %p112 = scmp.ne.s32.totalorder %s107, %s109
      %p113 = scmp.eq.s32.totalorder %s26, 0
      %p114 = por %p112, %p113
      %p115 = scmp.ne.s32.totalorder %s107, %s109
      %p116 = scmp.eq.s32.totalorder %s31, 1
      %p117 = por %p115, %p116
      %p118 = scmp.ne.s32.totalorder %s109, %s110
      %p119 = scmp.eq.s32.totalorder %s31, 0
      %p120 = por %p118, %p119
      %p121 = scmp.ne.s32.totalorder %s109, %s110
      %p122 = scmp.eq.s32.totalorder %s32, 1
      %p123 = por %p121, %p122
      %p125 = scmp.ne.s32.totalorder %s110, %s124
      %p126 = scmp.eq.s32.totalorder %s32, 0
      %p127 = por %p125, %p126
      %s129 = sadd.s32 %s128, 1
      %p132 = scmp.eq.s32.totalorder %s26, 1
      %p133 = scmp.ne.s32.totalorder %s128, %s130
      %p134 = scmp.eq.s32.totalorder %s26, 0
      %p135 = por %p133, %p134
      %p136 = scmp.ne.s32.totalorder %s128, %s130
      %p137 = scmp.eq.s32.totalorder %s31, 1
      %p138 = por %p136, %p137
      %p139 = scmp.ne.s32.totalorder %s130, %s131
      %p140 = scmp.eq.s32.totalorder %s31, 0
      %p141 = por %p139, %p140
      %p142 = scmp.ne.s32.totalorder %s130, %s131
      %p143 = scmp.eq.s32.totalorder %s32, 1
      %p144 = por %p142, %p143
      %p146 = scmp.ne.s32.totalorder %s131, %s145
      %p147 = scmp.eq.s32.totalorder %s32, 0
      %p148 = por %p146, %p147
      %s150 = sadd.s32 %s149, 1
      %p153 = scmp.eq.s32.totalorder %s26, 1
      %p154 = scmp.ne.s32.totalorder %s149, %s151
      %p155 = scmp.eq.s32.totalorder %s26, 0
      %p156 = por %p154, %p155
      %p157 = scmp.ne.s32.totalorder %s149, %s151
      %p158 = scmp.eq.s32.totalorder %s31, 1
      %p159 = por %p157, %p158
      %p160 = scmp.ne.s32.totalorder %s151, %s152
      %p161 = scmp.eq.s32.totalorder %s31, 0
      %p162 = por %p160, %p161
      %p163 = scmp.ne.s32.totalorder %s151, %s152
      %p164 = scmp.eq.s32.totalorder %s32, 1
      %p165 = por %p163, %p164
      %p167 = scmp.ne.s32.totalorder %s152, %s166
      %p168 = scmp.eq.s32.totalorder %s32, 0
      %p169 = por %p167, %p168
      %s171 = sadd.s32 %s170, 1
      %p174 = scmp.eq.s32.totalorder %s26, 1
      %p175 = scmp.ne.s32.totalorder %s170, %s172
      %p176 = scmp.eq.s32.totalorder %s26, 0
      %p177 = por %p175, %p176
      %p178 = scmp.ne.s32.totalorder %s170, %s172
      %p179 = scmp.eq.s32.totalorder %s31, 1
      %p180 = por %p178, %p179
      %p181 = scmp.ne.s32.totalorder %s172, %s173
      %p182 = scmp.eq.s32.totalorder %s31, 0
      %p183 = por %p181, %p182
      %p184 = scmp.ne.s32.totalorder %s172, %s173
      %p185 = scmp.eq.s32.totalorder %s32, 1
      %p186 = por %p184, %p185
      %p188 = scmp.ne.s32.totalorder %s173, %s187
      %p189 = scmp.eq.s32.totalorder %s32, 0
      %p190 = por %p188, %p189
      %s192 = sadd.s32 %s191, 1
      %p195 = scmp.eq.s32.totalorder %s26, 1
      %p196 = scmp.ne.s32.totalorder %s191, %s193
      %p197 = scmp.eq.s32.totalorder %s26, 0
      %p198 = por %p196, %p197
      %p199 = scmp.ne.s32.totalorder %s191, %s193
      %p200 = scmp.eq.s32.totalorder %s31, 1
      %p201 = por %p199, %p200
      %p202 = scmp.ne.s32.totalorder %s193, %s194
      %p203 = scmp.eq.s32.totalorder %s31, 0
      %p204 = por %p202, %p203
      %p205 = scmp.ne.s32.totalorder %s193, %s194
      %p206 = scmp.eq.s32.totalorder %s32, 1
      %p207 = por %p205, %p206
      %p209 = scmp.ne.s32.totalorder %s194, %s208
      %p210 = scmp.eq.s32.totalorder %s32, 0
      %p211 = por %p209, %p210
      %s212 = ssub.s32 %s26, %s33
      %p213 = scmp.eq.s32.totalorder %s212, 0
      %s215 = sadd.s32 %s214, 1
      %s216 = scalar_select %p213, %s214, %s215
      %p219 = pneg %p213
      %p220 = scmp.eq.s32.totalorder %s26, 1
      %p221 = por %p219, %p220
      %p222 = scmp.ne.s32.totalorder %s214, %s217
      %p223 = scmp.eq.s32.totalorder %s26, 0
      %p224 = por %p222, %p223
      %p225 = scmp.ne.s32.totalorder %s214, %s217
      %p226 = scmp.eq.s32.totalorder %s31, 1
      %p227 = por %p225, %p226
      %p228 = scmp.ne.s32.totalorder %s217, %s218
      %p229 = scmp.eq.s32.totalorder %s31, 0
      %p230 = por %p228, %p229
      %p231 = scmp.ne.s32.totalorder %s217, %s218
      %p232 = scmp.eq.s32.totalorder %s32, 1
      %p233 = por %p231, %p232
      %p235 = scmp.ne.s32.totalorder %s218, %s234
      %p236 = scmp.eq.s32.totalorder %s32, 0
      %p237 = por %p235, %p236
      %s238 = ssub.s32 %s26, %s33
      %p239 = scmp.eq.s32.totalorder %s238, 0
      %s241 = sadd.s32 %s240, 1
      %s242 = scalar_select %p239, %s240, %s241
      %p245 = pneg %p239
      %p246 = scmp.eq.s32.totalorder %s26, 1
      %p247 = por %p245, %p246
      %p248 = scmp.ne.s32.totalorder %s240, %s243
      %p249 = scmp.eq.s32.totalorder %s26, 0
      %p250 = por %p248, %p249
      %p251 = scmp.ne.s32.totalorder %s240, %s243
      %p252 = scmp.eq.s32.totalorder %s31, 1
      %p253 = por %p251, %p252
      %p254 = scmp.ne.s32.totalorder %s243, %s244
      %p255 = scmp.eq.s32.totalorder %s31, 0
      %p256 = por %p254, %p255
      %p257 = scmp.ne.s32.totalorder %s243, %s244
      %p258 = scmp.eq.s32.totalorder %s32, 1
      %p259 = por %p257, %p258
      %p261 = scmp.ne.s32.totalorder %s244, %s260
      %p262 = scmp.eq.s32.totalorder %s32, 0
      %p263 = por %p261, %p262
      %p264 = scmp.le.s32.totalorder 1, %s26
      %p265 = scmp.lt.s32.totalorder %s26, 3
      %p266 = pnand %p264, %p265
      %p267 = pneg %p266
      // Predicated region
      $region9: #{tpu_custom_call.1} parent=5 // pred_check
        _
      $region10: #{tpu_custom_call.1} parent=5 // pred_check_branch
        %269 = sbr.rel (%p266) target = $region12
      $region11: #{tpu_custom_call.1} parent=5 // pred_region
        %s270 = ssub.s32 %s26, 1
        // Predicated region
        $region13: #{tpu_custom_call.1} parent=11 // pred_check
          %p271 = pneg %p99
        $region14: #{tpu_custom_call.1} parent=11 // pred_check_branch
          %273 = sbr.rel (%p271) target = $region16
        $region15: #{tpu_custom_call.1} parent=11 // pred_region
          _
        $region16: #{tpu_custom_call.1} parent=11 // pred_fallthru
          _
        // Predicated region
        $region17: #{tpu_custom_call.1} parent=11 // pred_check
          %p274 = pneg %p120
        $region18: #{tpu_custom_call.1} parent=11 // pred_check_branch
          %276 = sbr.rel (%p274) target = $region20
        $region19: #{tpu_custom_call.1} parent=11 // pred_region
          _
        $region20: #{tpu_custom_call.1} parent=11 // pred_fallthru
          _
        // Predicated region
        $region21: #{tpu_custom_call.1} parent=11 // pred_check
          %p277 = pneg %p141
        $region22: #{tpu_custom_call.1} parent=11 // pred_check_branch
          %279 = sbr.rel (%p277) target = $region24
        $region23: #{tpu_custom_call.1} parent=11 // pred_region
          %281 = vsyncadd [#allocation6], 0
          %s282 = sshll.u32 %s4, 4
          %s283 = int_to_ptr.hbm [resolvable:$true] %s282
          %s284 = sshll.u32 [#allocation5], 4
          %s285 = int_to_ptr.vmem [resolvable:$true] %s284
          %290 = dma.hbm_to_vmem [thread:$0]  %s283, 256, %s285, [#allocation6], 64, 64, 4
        $region24: #{tpu_custom_call.1} parent=11 // pred_fallthru
          _
        // Predicated region
        $region25: #{tpu_custom_call.1} parent=11 // pred_check
          %p291 = pneg %p162
        $region26: #{tpu_custom_call.1} parent=11 // pred_check_branch
          %293 = sbr.rel (%p291) target = $region28
        $region27: #{tpu_custom_call.1} parent=11 // pred_region
          _
        $region28: #{tpu_custom_call.1} parent=11 // pred_fallthru
          _
        // Predicated region
        $region29: #{tpu_custom_call.1} parent=11 // pred_check
          %p294 = pneg %p183
        $region30: #{tpu_custom_call.1} parent=11 // pred_check_branch
          %296 = sbr.rel (%p294) target = $region32
        $region31: #{tpu_custom_call.1} parent=11 // pred_region
          %298 = vsyncadd [#allocation6], 0
          %s299 = sshll.u32 %s6, 4
          %s300 = int_to_ptr.hbm [resolvable:$true] %s299
          %s301 = sshll.u32 [#allocation7], 4
          %s302 = int_to_ptr.vmem [resolvable:$true] %s301
          %307 = dma.hbm_to_vmem [thread:$0]  %s300, 256, %s302, [#allocation6], 64, 64, 4
        $region32: #{tpu_custom_call.1} parent=11 // pred_fallthru
          _
        // Predicated region
        $region33: #{tpu_custom_call.1} parent=11 // pred_check
          %p308 = pneg %p204
        $region34: #{tpu_custom_call.1} parent=11 // pred_check_branch
          %310 = sbr.rel (%p308) target = $region36
        $region35: #{tpu_custom_call.1} parent=11 // pred_region
          _
        $region36: #{tpu_custom_call.1} parent=11 // pred_fallthru
          _
      $region12: #{tpu_custom_call.1} parent=5 // pred_fallthru
        _
      %p311 = scmp.lt.s32.totalorder %s26, 2
      // Predicated region
      $region37: #{tpu_custom_call.1} parent=5 // pred_check
        %p312 = pneg %p311
      $region38: #{tpu_custom_call.1} parent=5 // pred_check_branch
        %314 = sbr.rel (%p312) target = $region40
      $region39: #{tpu_custom_call.1} parent=5 // pred_region
        // Predicated region
        $region41: #{tpu_custom_call.1} parent=39 // pred_check
          %p315 = pneg %p46
        $region42: #{tpu_custom_call.1} parent=39 // pred_check_branch
          %317 = sbr.rel (%p315) target = $region44
        $region43: #{tpu_custom_call.1} parent=39 // pred_region
          %s318 = sand.u32 %s36, 1
          %s319 = scalar_lea.sflag [#allocation3], %s318
          %s320 = sand.u32 %s36, 1
          %s321 = smul.addr %s320, 32
          %s322 = scalar_lea.vmem [#allocation2], %s321
          %s323 = smul.u32 8, %s26
          %325 = vsyncadd %s319, 0
          %s326 = smul.addr %s323, 4
          %s327 = scalar_lea.hbm %s0, %s326
          %s328 = sshll.u32 %s327, 4
          %s329 = int_to_ptr.hbm [resolvable:$true] %s328
          %s330 = sshll.u32 %s322, 4
          %s331 = int_to_ptr.vmem [resolvable:$true] %s330
          %336 = dma.hbm_to_vmem [thread:$0]  %s329, 512, %s331, %s319, 64, 64, 4
        $region44: #{tpu_custom_call.1} parent=39 // pred_fallthru
          _
        // Predicated region
        $region45: #{tpu_custom_call.1} parent=39 // pred_check
          %p337 = pneg %p72
        $region46: #{tpu_custom_call.1} parent=39 // pred_check_branch
          %339 = sbr.rel (%p337) target = $region48
        $region47: #{tpu_custom_call.1} parent=39 // pred_region
          %p340 = scmp.lt.s32.totalorder %s26, 1
          %s341 = scalar_select %p340, %s26, 1
          %s342 = smul.addr %s341, 8
          %s343 = scalar_lea.vmem %s1, %s342
        $region48: #{tpu_custom_call.1} parent=39 // pred_fallthru
          _
      $region40: #{tpu_custom_call.1} parent=5 // pred_fallthru
        _
      %p344 = scmp.le.s32.totalorder 1, %s26
      %p345 = scmp.lt.s32.totalorder %s26, 3
      %p346 = pnand %p344, %p345
      %p347 = pneg %p346
      // Predicated region
      $region49: #{tpu_custom_call.1} parent=5 // pred_check
        _
      $region50: #{tpu_custom_call.1} parent=5 // pred_check_branch
        %349 = sbr.rel (%p346) target = $region52
      $region51: #{tpu_custom_call.1} parent=5 // pred_region
        %s350 = ssub.s32 %s26, 1
        %s351 = sand.u32 %s39, 1
        %s352 = scalar_lea.sflag [#allocation3], %s351
        %s353 = sand.u32 %s39, 1
        %s354 = smul.addr %s353, 32
        %s355 = scalar_lea.vmem [#allocation2], %s354
        // Predicated region
        $region53: #{tpu_custom_call.1} parent=51 // pred_check
          %p356 = pneg %p52
        $region54: #{tpu_custom_call.1} parent=51 // pred_check_branch
          %358 = sbr.rel (%p356) target = $region56
        $region55: #{tpu_custom_call.1} parent=51 // pred_region
          %360 = dma.done %s352, 512
        $region56: #{tpu_custom_call.1} parent=51 // pred_fallthru
          _
        // Predicated region
        $region57: #{tpu_custom_call.1} parent=51 // pred_check
          %p361 = pneg %p141
        $region58: #{tpu_custom_call.1} parent=51 // pred_check_branch
          %363 = sbr.rel (%p361) target = $region60
        $region59: #{tpu_custom_call.1} parent=51 // pred_region
          %365 = dma.done [#allocation6], 256
        $region60: #{tpu_custom_call.1} parent=51 // pred_fallthru
          _
        // Predicated region
        $region61: #{tpu_custom_call.1} parent=51 // pred_check
          %p366 = pneg %p183
        $region62: #{tpu_custom_call.1} parent=51 // pred_check_branch
          %368 = sbr.rel (%p366) target = $region64
        $region63: #{tpu_custom_call.1} parent=51 // pred_region
          %370 = dma.done [#allocation6], 256
        $region64: #{tpu_custom_call.1} parent=51 // pred_fallthru
          _
        %s371 = sand.u32 %s39, 1
        %s372 = scalar_lea.sflag [#allocation3], %s371
        %s373 = sand.u32 %s39, 1
        %s374 = smul.addr %s373, 32
        %s375 = scalar_lea.vmem [#allocation2], %s374
        %p376 = pneg %p52
        %p377 = pneg %p49
        %p378 = scmp.lt.s32.totalorder %s31, 1
        %s379 = scalar_select %p378, %s31, 1
        %s380 = smul.addr %s379, 8
        %s381 = scalar_lea.vmem %s1, %s380
        %p382 = pneg %p78
        %p383 = pneg %p75
        %p384 = pneg %p99
        %p385 = pneg %p96
        %p386 = pneg %p120
        %p387 = pneg %p117
        %p388 = pneg %p141
        %p389 = pneg %p138
        %p390 = pneg %p162
        %p391 = pneg %p159
        %p392 = pneg %p183
        %p393 = pneg %p180
        %p394 = pneg %p204
        %p395 = pneg %p201
        %p396 = pneg %p230
        %p397 = pneg %p227
        %s398 = sand.u32 %s217, 1
        %s399 = scalar_lea.sflag [#allocation4], %s398
        %s400 = sand.u32 %s217, 1
        %s401 = smul.addr %s400, 8
        %s402 = scalar_lea.vmem [#allocation8], %s401
        %p403 = pneg %p256
        %p404 = pneg %p253
        %s405 = sand.u32 %s243, 1
        %s406 = scalar_lea.sflag [#allocation10], %s405
        %s407 = sand.u32 %s243, 1
        %s408 = smul.addr %s407, 8
        %s409 = scalar_lea.vmem [#allocation9], %s408
        %s410 = smul.u32 8, %s31
        %p411 = scmp.lt.s32.totalorder %s31, 1
        %s412 = scalar_select %p411, %s31, 1
        %s413 = smul.addr %s412, 8
        %s414 = scalar_lea.vmem %s1, %s413
        %v416 = vld [vmem:[%s355] sm:$0xf]
        %v417 = vld [vmem:[%s355 + $0x4] sm:$0xf]
        %v418 = vld [vmem:[%s355 + $0x8] sm:$0xf]
        %v419 = vld [vmem:[%s355 + $0xc] sm:$0xf]
        %v420 = vld [vmem:[%s355 + $0x10] sm:$0xf]
        %v421 = vld [vmem:[%s355 + $0x14] sm:$0xf]
        %v422 = vld [vmem:[%s355 + $0x18] sm:$0xf]
        %v423 = vld [vmem:[%s355 + $0x1c] sm:$0xf]
        %v424 = vunpack.c.l.bf16 %v416
        %v425 = vunpack.c.l.bf16 %v417
        %v426 = vunpack.c.l.bf16 %v418
        %v427 = vunpack.c.l.bf16 %v419
        %v428 = vunpack.c.l.bf16 %v420
        %v429 = vunpack.c.l.bf16 %v421
        %v430 = vunpack.c.l.bf16 %v422
        %v431 = vunpack.c.l.bf16 %v423
        %v432 = vld [vmem:[%s414] sm:$0xff]
        %v433 = vperm.slane %v432, 0
        %v434 = vlaneseq
        %v435 = vshrl.u32 %v434, 7
        %437 = vset.pattern.permute.xlu0 %v435
        %438 = vperm.xlu0 %437, %v433
        %v439 = vpop.permute.xlu0 %438
        %v440 = vperm.slane %v432, 1
        %v441 = vlaneseq
        %v442 = vshrl.u32 %v441, 7
        %444 = vset.pattern.permute.xlu0 %v442
        %445 = vperm.xlu0 %444, %v440
        %v446 = vpop.permute.xlu0 %445
        %v447 = vperm.slane %v432, 2
        %v448 = vlaneseq
        %v449 = vshrl.u32 %v448, 7
        %451 = vset.pattern.permute.xlu0 %v449
        %452 = vperm.xlu0 %451, %v447
        %v453 = vpop.permute.xlu0 %452
        %v454 = vperm.slane %v432, 3
        %v455 = vlaneseq
        %v456 = vshrl.u32 %v455, 7
        %458 = vset.pattern.permute.xlu0 %v456
        %459 = vperm.xlu0 %458, %v454
        %v460 = vpop.permute.xlu0 %459
        %v461 = vperm.slane %v432, 4
        %v462 = vlaneseq
        %v463 = vshrl.u32 %v462, 7
        %465 = vset.pattern.permute.xlu0 %v463
        %466 = vperm.xlu0 %465, %v461
        %v467 = vpop.permute.xlu0 %466
        %v468 = vperm.slane %v432, 5
        %v469 = vlaneseq
        %v470 = vshrl.u32 %v469, 7
        %472 = vset.pattern.permute.xlu0 %v470
        %473 = vperm.xlu0 %472, %v468
        %v474 = vpop.permute.xlu0 %473
        %v475 = vperm.slane %v432, 6
        %v476 = vlaneseq
        %v477 = vshrl.u32 %v476, 7
        %479 = vset.pattern.permute.xlu0 %v477
        %480 = vperm.xlu0 %479, %v475
        %v481 = vpop.permute.xlu0 %480
        %v482 = vperm.slane %v432, 7
        %v483 = vlaneseq
        %v484 = vshrl.u32 %v483, 7
        %486 = vset.pattern.permute.xlu0 %v484
        %487 = vperm.xlu0 %486, %v482
        %v488 = vpop.permute.xlu0 %487
        %v489 = vmul.f32 %v424, %v439
        %v490 = vmul.f32 %v425, %v446
        %v491 = vmul.f32 %v426, %v453
        %v492 = vmul.f32 %v427, %v460
        %v493 = vmul.f32 %v428, %v467
        %v494 = vmul.f32 %v429, %v474
        %v495 = vmul.f32 %v430, %v481
        %v496 = vmul.f32 %v431, %v488
        %vm497 = vcmask 261120
        %v498 = vsel %vm497, %v489, 0.0
        %v499 = vrot.slane %v498, 4
        %v500 = vadd.f32 %v498, %v499
        %v501 = vrot.slane %v500, 2
        %v502 = vadd.f32 %v500, %v501
        %v503 = vrot.slane %v502, 1
        %v504 = vadd.f32 %v502, %v503
        %v505 = vsel %vm497, %v490, 0.0
        %v506 = vrot.slane %v505, 4
        %v507 = vadd.f32 %v505, %v506
        %v508 = vrot.slane %v507, 2
        %v509 = vadd.f32 %v507, %v508
        %v510 = vrot.slane %v509, 1
        %v511 = vadd.f32 %v509, %v510
        %v512 = vsel %vm497, %v491, 0.0
        %v513 = vrot.slane %v512, 4
        %v514 = vadd.f32 %v512, %v513
        %v515 = vrot.slane %v514, 2
        %v516 = vadd.f32 %v514, %v515
        %v517 = vrot.slane %v516, 1
        %v518 = vadd.f32 %v516, %v517
        %v519 = vsel %vm497, %v492, 0.0
        %v520 = vrot.slane %v519, 4
        %v521 = vadd.f32 %v519, %v520
        %v522 = vrot.slane %v521, 2
        %v523 = vadd.f32 %v521, %v522
        %v524 = vrot.slane %v523, 1
        %v525 = vadd.f32 %v523, %v524
        %v526 = vsel %vm497, %v493, 0.0
        %v527 = vrot.slane %v526, 4
        %v528 = vadd.f32 %v526, %v527
        %v529 = vrot.slane %v528, 2
        %v530 = vadd.f32 %v528, %v529
        %v531 = vrot.slane %v530, 1
        %v532 = vadd.f32 %v530, %v531
        %v533 = vsel %vm497, %v494, 0.0
        %v534 = vrot.slane %v533, 4
        %v535 = vadd.f32 %v533, %v534
        %v536 = vrot.slane %v535, 2
        %v537 = vadd.f32 %v535, %v536
        %v538 = vrot.slane %v537, 1
        %v539 = vadd.f32 %v537, %v538
        %v540 = vsel %vm497, %v495, 0.0
        %v541 = vrot.slane %v540, 4
        %v542 = vadd.f32 %v540, %v541
        %v543 = vrot.slane %v542, 2
        %v544 = vadd.f32 %v542, %v543
        %v545 = vrot.slane %v544, 1
        %v546 = vadd.f32 %v544, %v545
        %v547 = vsel %vm497, %v496, 0.0
        %v548 = vrot.slane %v547, 4
        %v549 = vadd.f32 %v547, %v548
        %v550 = vrot.slane %v549, 2
        %v551 = vadd.f32 %v549, %v550
        %v552 = vrot.slane %v551, 1
        %v553 = vadd.f32 %v551, %v552
        %vm554 = vcmask 64512
        %v555 = vsel %vm554, %v432, 0.0
        %556 = vadd.xlane.f32.xlu0 %v555
        %v557 = vpop.xlane.xlu0 %556
        %v558 = vmax.f32 %v557, 1e-09
        %v559 = vrcp.pop %v558
        %v561 = vrot.slane %v559, 1
        %v562 = vrot.slane %v559, 2
        %v563 = vrot.slane %v559, 3
        %v564 = vrot.slane %v559, 4
        %v565 = vrot.slane %v559, 5
        %v566 = vrot.slane %v559, 6
        %v567 = vrot.slane %v559, 7
        %v576 = vmul.f32 %v504, %v559
        %v577 = vmul.f32 %v511, %v561
        %v578 = vmul.f32 %v518, %v562
        %v579 = vmul.f32 %v525, %v563
        %v580 = vmul.f32 %v532, %v564
        %v581 = vmul.f32 %v539, %v565
        %v582 = vmul.f32 %v546, %v566
        %v583 = vmul.f32 %v553, %v567
        %v584 = vpack.c.bf16 %v576, %v576
        %v585 = vpack.c.bf16 %v577, %v577
        %v586 = vpack.c.bf16 %v578, %v578
        %v587 = vpack.c.bf16 %v579, %v579
        %v588 = vpack.c.bf16 %v580, %v580
        %v589 = vpack.c.bf16 %v581, %v581
        %v590 = vpack.c.bf16 %v582, %v582
        %v591 = vpack.c.bf16 %v583, %v583
        %v592 = vld [vmem:[%s2] sm:$0xf]
        %v593 = vld [vmem:[%s2 + $0x4] sm:$0xf]
        %v594 = vld [vmem:[%s2 + $0x8] sm:$0xf]
        %v595 = vld [vmem:[%s2 + $0xc] sm:$0xf]
        %v596 = vld [vmem:[%s3] sm:$0x1]
        %v598 = vperm.slane %v596, 0
        %v608 = vunpack.c.l.b16 %v584
        %v609 = vunpack.c.l.b16 %v585
        %v610 = vunpack.c.l.b16 %v586
        %v611 = vunpack.c.l.b16 %v587
        %v612 = vunpack.c.l.b16 %v588
        %v613 = vunpack.c.l.b16 %v589
        %v614 = vunpack.c.l.b16 %v590
        %v615 = vunpack.c.l.b16 %v591
        %v616 = vrot.slane %v609, 7
        %vm617 = vcmask 1041409
        %v618 = vsel %vm617, %v616, %v608
        %v619 = vrot.slane %v610, 6
        %vm620 = vcmask 1042434
        %v621 = vsel %vm620, %v619, %v618
        %v622 = vrot.slane %v611, 5
        %vm623 = vcmask 1043459
        %v624 = vsel %vm623, %v622, %v621
        %v625 = vrot.slane %v612, 4
        %vm626 = vcmask 1044484
        %v627 = vsel %vm626, %v625, %v624
        %v628 = vrot.slane %v613, 3
        %vm629 = vcmask 1045509
        %v630 = vsel %vm629, %v628, %v627
        %v631 = vrot.slane %v614, 2
        %vm632 = vcmask 1046534
        %v633 = vsel %vm632, %v631, %v630
        %v634 = vrot.slane %v615, 1
        %vm635 = vcmask 1047559
        %v636 = vsel %vm635, %v634, %v633
        %v637 = vpack.c.b16 %v636, %v636
        %v642 = vunpack.c.l.b16 %v592
        %v643 = vunpack.c.l.b16 %v593
        %v644 = vunpack.c.l.b16 %v594
        %v645 = vunpack.c.l.b16 %v595
        %v646 = vpack.c.b16 %v643, %v642
        %v647 = vpack.c.b16 %v645, %v644
        %v651 = vsel %vm497, %v637, 0
        %653 = vmatpush.bf16.msra.mxu0 0
        %654 = vmatpush.bf16.msra.mxu0 0
        %655 = vmatpush.bf16.msra.mxu0 0
        %656 = vmatpush.bf16.msra.mxu0 0
        %657 = vmatpush.bf16.msra.mxu0 0
        %658 = vmatpush.bf16.msra.mxu0 0
        %659 = vmatpush.bf16.msra.mxu0 %v647
        %660 = vmatpush.bf16.msra.mxu0 %v646
        %661 = vmatmul.bf16.gmra.mxu0 %v651
        %v662 = vpop.f32.mrf.mxu0
        %v663 = vadd.f32 %v598, %v662
        %v664 = vpop.f32.mrf.mxu0
        %665 = vdwg.mxu0
        %v666 = vmax.f32 %v663, 0.0
        %v667 = vpack.c.bf16 %v666, %v666
        %v668 = vld [vmem:[#allocation5] sm:$0xf]
        %v669 = vld [vmem:[#allocation5 + $0x4] sm:$0xf]
        %v670 = vld [vmem:[#allocation5 + $0x8] sm:$0xf]
        %v671 = vld [vmem:[#allocation5 + $0xc] sm:$0xf]
        %v672 = vld [vmem:[%s5] sm:$0x1]
        %v674 = vperm.slane %v672, 0
        %v680 = vunpack.c.l.b16 %v668
        %v681 = vunpack.c.l.b16 %v669
        %v682 = vunpack.c.l.b16 %v670
        %v683 = vunpack.c.l.b16 %v671
        %v684 = vpack.c.b16 %v681, %v680
        %v685 = vpack.c.b16 %v683, %v682
        %v689 = vsel %vm497, %v667, 0
        %691 = vmatpush.bf16.msra.mxu0 0
        %692 = vmatpush.bf16.msra.mxu0 0
        %693 = vmatpush.bf16.msra.mxu0 0
        %694 = vmatpush.bf16.msra.mxu0 0
        %695 = vmatpush.bf16.msra.mxu0 0
        %696 = vmatpush.bf16.msra.mxu0 0
        %697 = vmatpush.bf16.msra.mxu0 %v685
        %698 = vmatpush.bf16.msra.mxu0 %v684
        %699 = vmatmul.bf16.gmra.mxu0 %v689
        %v700 = vpop.f32.mrf.mxu0
        %v701 = vadd.f32 %v674, %v700
        %v702 = vpop.f32.mrf.mxu0
        %703 = vdwg.mxu0
        %v704 = vmul.f32 %v701, %v701
        %705 = vadd.xlane.f32.xlu0 %v704
        %v706 = vpop.xlane.xlu0 %705
        %v707 = vmax.f32 %v706, 1e-24
        %v708 = vrsqrt.pop %v707
        %v709 = vmul.f32 %v708, %v707
        %v710 = vmul.f32 %v709, %v708
        %v711 = vmul.f32 0.5, %v710
        %v712 = vsub.f32 1.5, %v711
        %v713 = vmul.f32 %v708, %v712
        %vm714 = vweird.f32 %v707
        %vm715 = vweird.f32 %v708
        %vm716 = vmor %vm714, %vm715
        %v717 = vsel %vm716, %v708, %v713
        %v718 = vmul.f32 %v701, %v717
        %719 = vst [vmem:[%s402] sm:$0xff] %v718
        %v720 = vld [vmem:[#allocation7] sm:$0xf]
        %v721 = vld [vmem:[#allocation7 + $0x4] sm:$0xf]
        %v722 = vld [vmem:[#allocation7 + $0x8] sm:$0xf]
        %v723 = vld [vmem:[#allocation7 + $0xc] sm:$0xf]
        %v724 = vld [vmem:[%s7] sm:$0x1]
        %v726 = vperm.slane %v724, 0
        %729 = vrot.lane.b32.xlu0 %v667, 96
        %v730 = vpop.permute.xlu0 %729
        %v735 = vunpack.c.l.b16 %v720
        %v736 = vunpack.c.l.b16 %v721
        %v737 = vunpack.c.l.b16 %v722
        %v738 = vunpack.c.l.b16 %v723
        %v739 = vpack.c.b16 %v736, %v735
        %v740 = vpack.c.b16 %v738, %v737
        %v744 = vsel %vm497, %v730, 0
        %746 = vmatpush.bf16.msra.mxu0 0
        %747 = vmatpush.bf16.msra.mxu0 0
        %748 = vmatpush.bf16.msra.mxu0 0
        %749 = vmatpush.bf16.msra.mxu0 0
        %750 = vmatpush.bf16.msra.mxu0 0
        %751 = vmatpush.bf16.msra.mxu0 0
        %752 = vmatpush.bf16.msra.mxu0 %v740
        %753 = vmatpush.bf16.msra.mxu0 %v739
        %754 = vmatmul.bf16.gmra.mxu0 %v744
        %v755 = vpop.f32.mrf.mxu0
        %v756 = vadd.f32 %v726, %v755
        %v757 = vpop.f32.mrf.mxu0
        %758 = vdwg.mxu0
        %759 = vmax.xlane.f32.xlu0 %v756
        %v760 = vpop.xlane.xlu0 %759
        %v761 = vsub.f32 %v756, %v760
        %v762 = vmul.f32 %v761, 1.442695
        %v763 = vpow.pop %v762
        %764 = vadd.xlane.f32.xlu0 %v763
        %v765 = vpop.xlane.xlu0 %764
        %v766 = vrcp.pop %v765
        %v767 = vmul.f32 %v763, %v766
        %768 = vst [vmem:[%s409] sm:$0xff] %v767
        %s769 = sand.u32 %s217, 1
        %s770 = scalar_lea.sflag [#allocation4], %s769
        %s771 = sand.u32 %s217, 1
        %s772 = smul.addr %s771, 8
        %s773 = scalar_lea.vmem [#allocation8], %s772
        %s774 = sand.u32 %s243, 1
        %s775 = scalar_lea.sflag [#allocation10], %s774
        %s776 = sand.u32 %s243, 1
        %s777 = smul.addr %s776, 8
        %s778 = scalar_lea.vmem [#allocation9], %s777
        // Predicated region
        $region65: #{tpu_custom_call.1} parent=51 // pred_check
          %p779 = pneg %p227
        $region66: #{tpu_custom_call.1} parent=51 // pred_check_branch
          %781 = sbr.rel (%p779) target = $region68
        $region67: #{tpu_custom_call.1} parent=51 // pred_region
          %783 = vsyncadd %s770, 0
          %s784 = smul.addr %s31, 8
          %s785 = scalar_lea.hbm %s8, %s784
          %s787 = sshll.u32 %s773, 4
          %s788 = int_to_ptr.vmem [resolvable:$true] %s787
          %s789 = sshll.u32 %s785, 4
          %s790 = int_to_ptr.hbm [resolvable:$true] %s789
          %792 = dma.vmem_to_hbm [thread:$0]  %s788, 128, %s790, %s770
        $region68: #{tpu_custom_call.1} parent=51 // pred_fallthru
          _
        // Predicated region
        $region69: #{tpu_custom_call.1} parent=51 // pred_check
          %p793 = pneg %p253
        $region70: #{tpu_custom_call.1} parent=51 // pred_check_branch
          %795 = sbr.rel (%p793) target = $region72
        $region71: #{tpu_custom_call.1} parent=51 // pred_region
          %797 = vsyncadd %s775, 0
          %s798 = smul.addr %s31, 8
          %s799 = scalar_lea.hbm %s9, %s798
          %s801 = sshll.u32 %s778, 4
          %s802 = int_to_ptr.vmem [resolvable:$true] %s801
          %s803 = sshll.u32 %s799, 4
          %s804 = int_to_ptr.hbm [resolvable:$true] %s803
          %806 = dma.vmem_to_hbm [thread:$0]  %s802, 128, %s804, %s775
        $region72: #{tpu_custom_call.1} parent=51 // pred_fallthru
          _
      $region52: #{tpu_custom_call.1} parent=5 // pred_fallthru
        _
      %p807 = scmp.le.s32.totalorder 2, %s26
      // Predicated region
      $region73: #{tpu_custom_call.1} parent=5 // pred_check
        %p808 = pneg %p807
      $region74: #{tpu_custom_call.1} parent=5 // pred_check_branch
        %810 = sbr.rel (%p808) target = $region76
      $region75: #{tpu_custom_call.1} parent=5 // pred_region
        %s811 = ssub.s32 %s26, 2
        // Predicated region
        $region77: #{tpu_custom_call.1} parent=75 // pred_check
          %p812 = pneg %p233
        $region78: #{tpu_custom_call.1} parent=75 // pred_check_branch
          %814 = sbr.rel (%p812) target = $region80
        $region79: #{tpu_custom_call.1} parent=75 // pred_region
          %s815 = sand.u32 %s218, 1
          %s816 = scalar_lea.sflag [#allocation4], %s815
          %s817 = sand.u32 %s218, 1
          %s818 = smul.addr %s817, 8
          %s819 = scalar_lea.vmem [#allocation8], %s818
          %821 = dma.done %s816, 128
        $region80: #{tpu_custom_call.1} parent=75 // pred_fallthru
          _
        // Predicated region
        $region81: #{tpu_custom_call.1} parent=75 // pred_check
          %p822 = pneg %p259
        $region82: #{tpu_custom_call.1} parent=75 // pred_check_branch
          %824 = sbr.rel (%p822) target = $region84
        $region83: #{tpu_custom_call.1} parent=75 // pred_region
          %s825 = sand.u32 %s244, 1
          %s826 = scalar_lea.sflag [#allocation10], %s825
          %s827 = sand.u32 %s244, 1
          %s828 = smul.addr %s827, 8
          %s829 = scalar_lea.vmem [#allocation9], %s828
          %831 = dma.done %s826, 128
        $region84: #{tpu_custom_call.1} parent=75 // pred_fallthru
          _
      $region76: #{tpu_custom_call.1} parent=5 // pred_fallthru
        _
    $region6: #{tpu_custom_call.1} parent=1 // loop_footer
      %s30 = sadd.s32 1, %s26
    $region7: #{tpu_custom_call.1} parent=1 // loop_footer_branch
      %25 = sbr.rel target = $region3
    $region8: #{tpu_custom_call.1} parent=1 // loop_exit
      _
    %832 = vsyncpa [#allocation3], 1
    %s833 = scalar_lea.sflag [#allocation3], 1
    %834 = vsyncpa %s833, 1
    %835 = vsyncpa [#allocation6], 1
    %836 = vsyncpa [#allocation4], 1
    %s837 = scalar_lea.sflag [#allocation4], 1
    %838 = vsyncpa %s837, 1
    %839 = vsyncpa [#allocation10], 1
    %s840 = scalar_lea.sflag [#allocation10], 1
    %841 = vsyncpa %s840, 1

</llo_original>
